<compile_context>
chip_gen: v7x
topology: tpu7x:2x2x1
jax: 0.10.0
libtpu: 0.0.40
codegen_flags: <defaults>
</compile_context>

<pallas_src>
import jax
import jax.numpy as jnp
from jax.experimental import pallas as pl
from jax.experimental.pallas import tpu as pltpu


# ---------------------------------------------------------------------------
# Static per-layer geometry (mirrors the F.pad logic of HighwayLayer.forward).
# ---------------------------------------------------------------------------
def _layer_cfgs(T, k_szs, dils, causality, use_glu):
    cfgs = []
    t_in = T
    for k, d in zip(k_szs, dils):
        if k != 1:
            pad_l, pad_r = (d * (k - 1), 0) if causality else (d, d)
        else:
            pad_l, pad_r = 0, 0
        t_out = t_in + pad_l + pad_r - d * (k - 1)
        if (not use_glu) and t_out != t_in:
            raise ValueError(
                "highway (non-GLU) residual requires conv output length == input length "
                "(causal, or k_sz in {1, 3} non-causal)")
        cfgs.append(dict(k=k, dil=d, pad_l=pad_l, pad_r=pad_r, t_in=t_in, t_out=t_out))
        t_in = t_out
    return cfgs


def _roundup(v, m):
    return -(-v // m) * m


# ---------------------------------------------------------------------------
# Fused kernel: all layers for one batch element.
# ---------------------------------------------------------------------------
def _make_block_kernel(cfgs, C, T_buf, To_pad, OFF_L, OFF_R, use_glu, per_tap, use_win,
                       cdt, eps=1e-5):
    n_layers = len(cfgs)

    def kernel(*refs):
        x_ref = refs[0]                      # (1, C, T_buf)       lane-padded input
        w_refs = refs[1:1 + n_layers]        # (2C, k_l*C) each    packed conv weights
        out_ref = refs[1 + n_layers]         # (1, C, To_pad)      lane-padded output
        act = refs[2 + n_layers]             # (C, OFF_L+T_buf+OFF_R) f32 scratch
        win = refs[3 + n_layers] if use_win else None   # (K_max, T_buf) cdt scratch

        # Zero only the small margins (never covered by the placement below).  This is
        # cheap (<=128+OFF_R lanes) and keeps every grid step independent, so the batch
        # axis can be safely split across TensorCores.
        if OFF_L > 0:
            act[:, 0:OFF_L] = jnp.zeros((C, OFF_L), jnp.float32)
        if OFF_R > 0:
            act[:, OFF_L + T_buf:OFF_L + T_buf + OFF_R] = jnp.zeros((C, OFF_R),
                                                                    jnp.float32)

        # Place the (already zero-tailed, lane-padded) input at offset OFF_L.  Shifted
        # conv windows then read exact F.pad(x, ...) semantics with static slices.
        act[:, OFF_L:OFF_L + T_buf] = x_ref[0].astype(jnp.float32)

        iota_t = jax.lax.broadcasted_iota(jnp.int32, (1, T_buf), 1)

        for l, cfg in enumerate(cfgs):
            k, dil, pad_l, t_out = cfg["k"], cfg["dil"], cfg["pad_l"], cfg["t_out"]
            w = w_refs[l][...]                                   # (2C, k*C), cdt

            # ---- dilated conv1d as channel-mixing matmul(s).  Conv bias omitted:
            # InstanceNorm1d(affine=False) cancels a per-channel constant exactly.
            if per_tap or k == 1:
                # k accumulating K=C matmuls (v5e-friendly; also the k==1 case).
                h = None
                for j in range(k):
                    s = j * dil - pad_l                          # static shift
                    xs = act[:, OFF_L + s:OFF_L + s + T_buf].astype(cdt)
                    wj = w[:, j * C:(j + 1) * C] if k > 1 else w
                    hj = jnp.dot(wj, xs, preferred_element_type=jnp.float32)
                    h = hj if h is None else h + hj
            else:
                # Assemble k shifted windows (cast to compute dtype on store) and do
                # ONE matmul with contraction depth k*C (feeds v6e/v7x's 256-deep MXU).
                for j in range(k):
                    s = j * dil - pad_l
                    win[j * C:(j + 1) * C, :] = (
                        act[:, OFF_L + s:OFF_L + s + T_buf].astype(cdt))
                h = jnp.dot(w, win[0:k * C, :], preferred_element_type=jnp.float32)

            # ---- InstanceNorm1d over the valid t_out positions (biased variance).
            # The masked copy is required: with left padding, h is NOT zero for the
            # first pad_l columns past t_out (they still read valid data).
            tmask = iota_t < t_out                               # (1, T_buf)
            inv_t = 1.0 / float(t_out)
            hm = jnp.where(tmask, h, 0.0)
            mean = jnp.sum(hm, axis=-1, keepdims=True) * inv_t
            var = jnp.sum(hm * hm, axis=-1, keepdims=True) * inv_t - mean * mean
            var = jnp.maximum(var, 0.0)                          # guard one-pass roundoff
            hn = (h - mean) * jax.lax.rsqrt(var + eps)

            # ---- gate
            h1 = hn[:C, :]
            h2 = hn[C:, :]
            if use_glu:
                out = h1 * jax.nn.sigmoid(h2)                    # nn.GLU(dim=1)
            else:
                xres = act[:, OFF_L:OFF_L + T_buf]               # t_in == t_out
                g = jax.nn.sigmoid(h1)
                out = g * h2 + (1.0 - g) * xres

            if l == n_layers - 1:
                # Lane-dense store; the padding columns are sliced off outside.
                out_ref[0] = out[:, :To_pad].astype(out_ref.dtype)
            else:
                # Masked writeback maintains the zero-tail invariant that the next
                # layer's right-padding reads (and its masked stats) depend on.
                act[:, OFF_L:OFF_L + T_buf] = jnp.where(tmask, out, 0.0)

    return kernel


# ---------------------------------------------------------------------------
# Wrapper: one pallas_call for the whole block.
# ---------------------------------------------------------------------------
def highway_dc_block(x, packed_ws, k_szs, dils, causality=False, use_glu=False,
                     per_tap=False):
    """Fused HighwayDCBlock.forward.

    x         : (N, C, T) float32
    packed_ws : per-layer packed conv weights, shape (2C, k_l*C), already in the desired
                MXU compute dtype (bf16 for production; packing hoisted out of forward).
    per_tap   : use k accumulating K=C matmuls instead of the packed window matmul
                (recommended on v5e, whose MXU is 128-deep; keep False on v6e/v7x).
    """
    N, C, T = x.shape
    n_layers = len(k_szs)
    assert n_layers >= 1 and len(dils) == n_layers and len(packed_ws) == n_layers
    for l, w in enumerate(packed_ws):
        assert w.shape == (2 * C, k_szs[l] * C), (l, w.shape)

    cfgs = _layer_cfgs(T, k_szs, dils, causality, use_glu)
    t_final = cfgs[-1]["t_out"]

    # Lane-dense working width / margins.
    t_max = max([T] + [c["t_out"] for c in cfgs])
    T_buf = max(128, _roundup(t_max, 128))
    To_pad = max(128, _roundup(t_final, 128))
    pad_max = max([0] + [c["pad_l"] for c in cfgs])
    OFF_L = 0 if pad_max == 0 else _roundup(pad_max, 128)   # lane-aligned left margin
    OFF_R = max([0] + [max(0, c["dil"] * (c["k"] - 1) - c["pad_l"]) for c in cfgs])
    L_SCR = OFF_L + T_buf + OFF_R

    cdt = packed_ws[0].dtype
    use_win = (not per_tap) and any(c["k"] > 1 for c in cfgs)
    K_max = max(c["k"] for c in cfgs) * C

    # Pad the input to T_buf in HBM: input DMA and all in-kernel activation accesses
    # become lane-dense, and the placement fully overwrites the working window.
    x_in = jnp.pad(x, ((0, 0), (0, 0), (0, T_buf - T))) if T_buf > T else x

    kernel = _make_block_kernel(cfgs, C, T_buf, To_pad, OFF_L, OFF_R, use_glu, per_tap,
                                use_win, cdt)

    in_specs = [pl.BlockSpec((1, C, T_buf), lambda n: (n, 0, 0))]
    for c in cfgs:
        kc = c["k"] * C
        # Constant block index -> weights are DMA'd to VMEM once and reused per batch.
        in_specs.append(pl.BlockSpec((2 * C, kc), lambda n: (0, 0)))

    scratch = [pltpu.VMEM((C, L_SCR), jnp.float32)]           # resident activation
    if use_win:
        scratch.append(pltpu.VMEM((K_max, T_buf), cdt))       # assembled conv windows

    # Explicit VMEM budget (v7x: 64 MiB physical, 32 MiB default scoped limit).
    itm = jnp.dtype(cdt).itemsize
    xitm = jnp.dtype(x.dtype).itemsize
    budget = (C * L_SCR * 4
              + (K_max * T_buf * itm if use_win else 0)
              + 2 * sum(2 * C * c["k"] * C * itm for c in cfgs)
              + 2 * C * T_buf * xitm
              + 2 * C * To_pad * xitm)
    vmem_limit = int(min(100 * 2 ** 20, max(32 * 2 ** 20, int(1.5 * budget))))

    out = pl.pallas_call(
        kernel,
        out_shape=jax.ShapeDtypeStruct((N, C, To_pad), x.dtype),
        grid_spec=pltpu.PrefetchScalarGridSpec(
            num_scalar_prefetch=0,
            grid=(N,),
            in_specs=in_specs,
            out_specs=pl.BlockSpec((1, C, To_pad), lambda n: (n, 0, 0)),
            scratch_shapes=scratch,
        ),
        compiler_params=pltpu.CompilerParams(
            dimension_semantics=("parallel",),
            vmem_limit_bytes=vmem_limit,
        ),
    )(x_in, *packed_ws)

    return out[:, :, :t_final] if To_pad != t_final else out


# ---------------------------------------------------------------------------
# Parameters.
# ---------------------------------------------------------------------------
def init_highway_dc_block_params(key, io_chs, k_szs):
    """Deterministic synthetic params; shapes follow nn.Conv1d(in_ch, 2*out_ch, k)."""
    params = []
    for l, (ch, k) in enumerate(zip(io_chs, k_szs)):
        kw, kb = jax.random.split(jax.random.fold_in(key, l))
        fan_in = ch * k
        bound = 1.0 / jnp.sqrt(jnp.float32(fan_in))
        w = jax.random.uniform(kw, (2 * ch, ch, k), jnp.float32, -bound, bound)
        b = jax.random.uniform(kb, (2 * ch,), jnp.float32, -bound, bound)
        params.append((w, b))
    return params


def pack_highway_params(params, dtype=jnp.bfloat16):
    """One-time weight repack: torch (2C, C, k) -> (2C, k*C), tap-major columns, cast to
    the MXU compute dtype (bf16 by default) so the kernel never re-casts weights.

    The conv bias is intentionally not packed: InstanceNorm1d(affine=False) right after
    the conv cancels any per-channel constant exactly, so the bias has no effect.
    """
    packed = []
    for w, _b in params:
        two_c, c_in, k = w.shape
        packed.append(jnp.transpose(w, (0, 2, 1)).reshape(two_c, k * c_in).astype(dtype))
    return packed


# ---------------------------------------------------------------------------
# Pure-JAX reference (keeps the bias to double-check the exact cancellation).
# ---------------------------------------------------------------------------
def _reference_block(x, params, k_szs, dils, causality, use_glu):
    h = x
    for (w, b), k, d in zip(params, k_szs, dils):
        C = w.shape[1]
        if k != 1:
            pad = (d * (k - 1), 0) if causality else (d, d)
        else:
            pad = (0, 0)
        xp = jnp.pad(h, ((0, 0), (0, 0), pad))
        t_out = xp.shape[-1] - d * (k - 1)
        conv = jnp.zeros((h.shape[0], 2 * C, t_out), jnp.float32)
        for j in range(k):
            conv = conv + jnp.einsum(
                "oc,nct->not", w[:, :, j], xp[:, :, j * d:j * d + t_out],
                precision=jax.lax.Precision.HIGHEST)
        conv = conv + b[None, :, None]
        mean = jnp.mean(conv, axis=-1, keepdims=True)
        var = jnp.mean((conv - mean) ** 2, axis=-1, keepdims=True)
        hn = (conv - mean) * jax.lax.rsqrt(var + 1e-5)
        h1, h2 = hn[:, :C, :], hn[:, C:, :]
        if use_glu:
            h = h1 * jax.nn.sigmoid(h2)
        else:
            g = jax.nn.sigmoid(h1)
            h = g * h2 + (1.0 - g) * h
    return h


if __name__ == "__main__":
    # Small config consistent with the module: 3 layers, same io channels,
    # kernel size 2, exponentially growing dilation, causal, highway (no GLU).
    io_chs = [4, 4, 4]
    k_szs = [2, 2, 2]
    dils = [1, 2, 4]
    causality = True
    use_glu = False

    N, C, T = 2, io_chs[0], 16  # layout: NCT
    key = jax.random.PRNGKey(0)
    kx, kp = jax.random.split(key)
    x = jax.random.normal(kx, (N, C, T), jnp.float32)

    params = init_highway_dc_block_params(kp, io_chs, k_szs)
    ref = _reference_block(x, params, k_szs, dils, causality, use_glu)

    # 1) f32-packed path: tight check of the kernel logic (mask/shift/IN exactness).
    pw_f32 = pack_highway_params(params, dtype=jnp.float32)
    out_f32 = jax.block_until_ready(
        highway_dc_block(x, pw_f32, k_szs, dils, causality=causality, use_glu=use_glu))
    assert out_f32.shape == (N, C, T), out_f32.shape
    assert bool(jnp.all(jnp.isfinite(out_f32)))
    assert bool(jnp.allclose(out_f32, ref, rtol=1e-3, atol=1e-3)), \
        float(jnp.max(jnp.abs(out_f32 - ref)))

    # 2) per-tap (v5e-style) variant, same f32 weights -> same tight tolerance.
    out_pt = jax.block_until_ready(
        highway_dc_block(x, pw_f32, k_szs, dils, causality=causality, use_glu=use_glu,
                         per_tap=True))
    assert bool(jnp.allclose(out_pt, ref, rtol=1e-3, atol=1e-3)), \
        float(jnp.max(jnp.abs(out_pt - ref)))

    # 3) production bf16 weight/window path (default pack dtype).  Compare against a
    #    reference using the same bf16-rounded weights so only the activation rounding
    #    differs; loose tolerance for bf16.
    pw_bf16 = pack_highway_params(params)
    out_bf16 = jax.block_until_ready(
        highway_dc_block(x, pw_bf16, k_szs, dils, causality=causality, use_glu=use_glu))
    params_rt = [(w.astype(jnp.bfloat16).astype(jnp.float32), b) for (w, b) in params]
    ref_rt = _reference_block(x, params_rt, k_szs, dils, causality, use_glu)
    assert out_bf16.shape == (N, C, T), out_bf16.shape
    assert bool(jnp.all(jnp.isfinite(out_bf16)))
    assert bool(jnp.allclose(out_bf16, ref_rt, rtol=1e-1, atol=1e-1)), \
        float(jnp.max(jnp.abs(out_bf16 - ref_rt)))

    print("KERNEL_OK")
</pallas_src>

<mosaic_0001>
module attributes {stable_mosaic.version = 11 : i64} {
  func.func @kernel(%arg0: i32, %arg1: memref<1x4x128xf32, #tpu.memory_space<vmem>>, %arg2: memref<8x8xf32, #tpu.memory_space<vmem>>, %arg3: memref<8x8xf32, #tpu.memory_space<vmem>>, %arg4: memref<8x8xf32, #tpu.memory_space<vmem>>, %arg5: memref<1x4x128xf32, #tpu.memory_space<vmem>>, %arg6: memref<4x256xf32, #tpu.memory_space<vmem>>, %arg7: memref<8x128xf32, #tpu.memory_space<vmem>>) attributes {dimension_semantics = [#tpu.dimension_semantics<parallel>], iteration_bounds = array<i64: 2>, scalar_prefetch = 0 : i64, scratch_operands = 2 : i64, tpu.core_type = #tpu.core_type<tc>, window_params = [{transform_indices = @transform_0, window_bounds = array<i64: 1, 4, 128>}, {pipeline_mode = #tpu.pipeline_mode<synchronous>, transform_indices = @transform_1, window_bounds = array<i64: 8, 8>}, {pipeline_mode = #tpu.pipeline_mode<synchronous>, transform_indices = @transform_2, window_bounds = array<i64: 8, 8>}, {pipeline_mode = #tpu.pipeline_mode<synchronous>, transform_indices = @transform_3, window_bounds = array<i64: 8, 8>}, {transform_indices = @transform_4, window_bounds = array<i64: 1, 4, 128>}]} {
    %cst = arith.constant 0.000000e+00 : f32
    %0 = vector.broadcast %cst : f32 to vector<4x128xf32>
    %c0 = arith.constant 0 : index
    %c0_0 = arith.constant 0 : index
    %1 = vector.load %arg6[%c0, %c0_0] : memref<4x256xf32, #tpu.memory_space<vmem>>, vector<4x128xf32>
    tpu.vector_store %arg6[%c0, %c0_0], %0 {strides = array<i32>} : memref<4x256xf32, #tpu.memory_space<vmem>>, vector<4x128xf32>,
    %c0_1 = arith.constant 0 : index
    %c0_2 = arith.constant 0 : index
    %c0_3 = arith.constant 0 : index
    %2 = vector.load %arg1[%c0_1, %c0_2, %c0_3] : memref<1x4x128xf32, #tpu.memory_space<vmem>>, vector<1x4x128xf32>
    %3 = vector.shape_cast %2 : vector<1x4x128xf32> to vector<4x128xf32>
    %c0_4 = arith.constant 0 : index
    %c128 = arith.constant 128 : index
    %4 = vector.load %arg6[%c0_4, %c128] : memref<4x256xf32, #tpu.memory_space<vmem>>, vector<4x128xf32>
    tpu.vector_store %arg6[%c0_4, %c128], %3 {strides = array<i32>} : memref<4x256xf32, #tpu.memory_space<vmem>>, vector<4x128xf32>,
    %5 = tpu.iota {dimensions = array<i32: 1>} : vector<1x128xi32>
    %c0_5 = arith.constant 0 : index
    %c0_6 = arith.constant 0 : index
    %6 = vector.load %arg2[%c0_5, %c0_6] : memref<8x8xf32, #tpu.memory_space<vmem>>, vector<8x8xf32>
    %c0_7 = arith.constant 0 : index
    %c127 = arith.constant 127 : index
    %7 = vector.load %arg6[%c0_7, %c127] : memref<4x256xf32, #tpu.memory_space<vmem>>, vector<4x128xf32>
    %c0_8 = arith.constant 0 : index
    %c0_9 = arith.constant 0 : index
    %8 = vector.load %arg7[%c0_8, %c0_9] : memref<8x128xf32, #tpu.memory_space<vmem>>, vector<4x128xf32>
    tpu.vector_store %arg7[%c0_8, %c0_9], %7 {strides = array<i32>} : memref<8x128xf32, #tpu.memory_space<vmem>>, vector<4x128xf32>,
    %c0_10 = arith.constant 0 : index
    %c128_11 = arith.constant 128 : index
    %9 = vector.load %arg6[%c0_10, %c128_11] : memref<4x256xf32, #tpu.memory_space<vmem>>, vector<4x128xf32>
    %c4 = arith.constant 4 : index
    %c0_12 = arith.constant 0 : index
    %10 = vector.load %arg7[%c4, %c0_12] : memref<8x128xf32, #tpu.memory_space<vmem>>, vector<4x128xf32>
    tpu.vector_store %arg7[%c4, %c0_12], %9 {strides = array<i32>} : memref<8x128xf32, #tpu.memory_space<vmem>>, vector<4x128xf32>,
    %c0_13 = arith.constant 0 : index
    %c0_14 = arith.constant 0 : index
    %11 = vector.load %arg7[%c0_13, %c0_14] : memref<8x128xf32, #tpu.memory_space<vmem>>, vector<8x128xf32>
    %cst_15 = arith.constant dense<0.000000e+00> : vector<8x128xf32>
    %12 = tpu.matmul %6, %11, %cst_15 {dimension_numbers = #tpu.dot_dimension_numbers<[1], [0], [0], [1], [0, 0, 1, 1], [], []>} : vector<8x8xf32>, vector<8x128xf32>, vector<8x128xf32> -> vector<8x128xf32>
    %c16_i32 = arith.constant 16 : i32
    %13 = vector.broadcast %c16_i32 : i32 to vector<1x128xi32>
    %14 = arith.cmpi slt, %5, %13 : vector<1x128xi32>
    %cst_16 = arith.constant 0.000000e+00 : f32
    %15 = vector.shape_cast %14 : vector<1x128xi1> to vector<1x128xi1>
    %16 = vector.broadcast %15 : vector<1x128xi1> to vector<8x128xi1>
    %17 = vector.broadcast %cst_16 : f32 to vector<8x128xf32>
    %18 = arith.select %16, %12, %17 : vector<8x128xi1>, vector<8x128xf32>
    %cst_17 = arith.constant dense<0.000000e+00> : vector<8xf32>
    %19 = vector.multi_reduction <add>, %18, %cst_17 [1] : vector<8x128xf32> to vector<8xf32>
    %20 = vector.shape_cast %19 : vector<8xf32> to vector<8x1xf32>
    %cst_18 = arith.constant 6.250000e-02 : f32
    %21 = vector.broadcast %cst_18 : f32 to vector<8x1xf32>
    %22 = arith.mulf %20, %21 : vector<8x1xf32>
    %23 = arith.mulf %18, %18 : vector<8x128xf32>
    %cst_19 = arith.constant dense<0.000000e+00> : vector<8xf32>
    %24 = vector.multi_reduction <add>, %23, %cst_19 [1] : vector<8x128xf32> to vector<8xf32>
    %25 = vector.shape_cast %24 : vector<8xf32> to vector<8x1xf32>
    %cst_20 = arith.constant 6.250000e-02 : f32
    %26 = vector.broadcast %cst_20 : f32 to vector<8x1xf32>
    %27 = arith.mulf %25, %26 : vector<8x1xf32>
    %28 = arith.mulf %22, %22 : vector<8x1xf32>
    %29 = arith.subf %27, %28 : vector<8x1xf32>
    %cst_21 = arith.constant 0.000000e+00 : f32
    %30 = vector.broadcast %cst_21 : f32 to vector<8x1xf32>
    %31 = arith.maximumf %29, %30 : vector<8x1xf32>
    %32 = vector.broadcast %22 : vector<8x1xf32> to vector<8x128xf32>
    %33 = arith.subf %12, %32 : vector<8x128xf32>
    %cst_22 = arith.constant 9.99999974E-6 : f32
    %34 = vector.broadcast %cst_22 : f32 to vector<8x1xf32>
    %35 = arith.addf %31, %34 : vector<8x1xf32>
    %36 = math.rsqrt %35 : vector<8x1xf32>
    %37 = vector.broadcast %36 : vector<8x1xf32> to vector<8x128xf32>
    %38 = arith.mulf %33, %37 : vector<8x128xf32>
    %39 = vector.extract_strided_slice %38 {offsets = [0, 0], sizes = [4, 128], strides = [1, 1]} : vector<8x128xf32> to vector<4x128xf32>
    %40 = vector.extract_strided_slice %38 {offsets = [4, 0], sizes = [4, 128], strides = [1, 1]} : vector<8x128xf32> to vector<4x128xf32>
    %c0_23 = arith.constant 0 : index
    %c128_24 = arith.constant 128 : index
    %41 = vector.load %arg6[%c0_23, %c128_24] : memref<4x256xf32, #tpu.memory_space<vmem>>, vector<4x128xf32>
    %42 = arith.negf %39 : vector<4x128xf32>
    %43 = math.exp %42 : vector<4x128xf32>
    %cst_25 = arith.constant 1.000000e+00 : f32
    %44 = vector.broadcast %cst_25 : f32 to vector<4x128xf32>
    %45 = arith.addf %44, %43 : vector<4x128xf32>
    %46 = arith.divf %44, %45 : vector<4x128xf32>
    %47 = arith.mulf %46, %40 : vector<4x128xf32>
    %cst_26 = arith.constant 1.000000e+00 : f32
    %48 = vector.broadcast %cst_26 : f32 to vector<4x128xf32>
    %49 = arith.subf %48, %46 : vector<4x128xf32>
    %50 = arith.mulf %49, %41 : vector<4x128xf32>
    %51 = arith.addf %47, %50 : vector<4x128xf32>
    %cst_27 = arith.constant 0.000000e+00 : f32
    %52 = vector.shape_cast %14 : vector<1x128xi1> to vector<1x128xi1>
    %53 = vector.broadcast %52 : vector<1x128xi1> to vector<4x128xi1>
    %54 = vector.broadcast %cst_27 : f32 to vector<4x128xf32>
    %55 = arith.select %53, %51, %54 : vector<4x128xi1>, vector<4x128xf32>
    %c0_28 = arith.constant 0 : index
    %c128_29 = arith.constant 128 : index
    %56 = vector.load %arg6[%c0_28, %c128_29] : memref<4x256xf32, #tpu.memory_space<vmem>>, vector<4x128xf32>
    tpu.vector_store %arg6[%c0_28, %c128_29], %55 {strides = array<i32>} : memref<4x256xf32, #tpu.memory_space<vmem>>, vector<4x128xf32>,
    %c0_30 = arith.constant 0 : index
    %c0_31 = arith.constant 0 : index
    %57 = vector.load %arg3[%c0_30, %c0_31] : memref<8x8xf32, #tpu.memory_space<vmem>>, vector<8x8xf32>
    %c0_32 = arith.constant 0 : index
    %c126 = arith.constant 126 : index
    %58 = vector.load %arg6[%c0_32, %c126] : memref<4x256xf32, #tpu.memory_space<vmem>>, vector<4x128xf32>
    %c0_33 = arith.constant 0 : index
    %c0_34 = arith.constant 0 : index
    %59 = vector.load %arg7[%c0_33, %c0_34] : memref<8x128xf32, #tpu.memory_space<vmem>>, vector<4x128xf32>
    tpu.vector_store %arg7[%c0_33, %c0_34], %58 {strides = array<i32>} : memref<8x128xf32, #tpu.memory_space<vmem>>, vector<4x128xf32>,
    %c0_35 = arith.constant 0 : index
    %c128_36 = arith.constant 128 : index
    %60 = vector.load %arg6[%c0_35, %c128_36] : memref<4x256xf32, #tpu.memory_space<vmem>>, vector<4x128xf32>
    %c4_37 = arith.constant 4 : index
    %c0_38 = arith.constant 0 : index
    %61 = vector.load %arg7[%c4_37, %c0_38] : memref<8x128xf32, #tpu.memory_space<vmem>>, vector<4x128xf32>
    tpu.vector_store %arg7[%c4_37, %c0_38], %60 {strides = array<i32>} : memref<8x128xf32, #tpu.memory_space<vmem>>, vector<4x128xf32>,
    %c0_39 = arith.constant 0 : index
    %c0_40 = arith.constant 0 : index
    %62 = vector.load %arg7[%c0_39, %c0_40] : memref<8x128xf32, #tpu.memory_space<vmem>>, vector<8x128xf32>
    %cst_41 = arith.constant dense<0.000000e+00> : vector<8x128xf32>
    %63 = tpu.matmul %57, %62, %cst_41 {dimension_numbers = #tpu.dot_dimension_numbers<[1], [0], [0], [1], [0, 0, 1, 1], [], []>} : vector<8x8xf32>, vector<8x128xf32>, vector<8x128xf32> -> vector<8x128xf32>
    %c16_i32_42 = arith.constant 16 : i32
    %64 = vector.broadcast %c16_i32_42 : i32 to vector<1x128xi32>
    %65 = arith.cmpi slt, %5, %64 : vector<1x128xi32>
    %cst_43 = arith.constant 0.000000e+00 : f32
    %66 = vector.shape_cast %65 : vector<1x128xi1> to vector<1x128xi1>
    %67 = vector.broadcast %66 : vector<1x128xi1> to vector<8x128xi1>
    %68 = vector.broadcast %cst_43 : f32 to vector<8x128xf32>
    %69 = arith.select %67, %63, %68 : vector<8x128xi1>, vector<8x128xf32>
    %cst_44 = arith.constant dense<0.000000e+00> : vector<8xf32>
    %70 = vector.multi_reduction <add>, %69, %cst_44 [1] : vector<8x128xf32> to vector<8xf32>
    %71 = vector.shape_cast %70 : vector<8xf32> to vector<8x1xf32>
    %cst_45 = arith.constant 6.250000e-02 : f32
    %72 = vector.broadcast %cst_45 : f32 to vector<8x1xf32>
    %73 = arith.mulf %71, %72 : vector<8x1xf32>
    %74 = arith.mulf %69, %69 : vector<8x128xf32>
    %cst_46 = arith.constant dense<0.000000e+00> : vector<8xf32>
    %75 = vector.multi_reduction <add>, %74, %cst_46 [1] : vector<8x128xf32> to vector<8xf32>
    %76 = vector.shape_cast %75 : vector<8xf32> to vector<8x1xf32>
    %cst_47 = arith.constant 6.250000e-02 : f32
    %77 = vector.broadcast %cst_47 : f32 to vector<8x1xf32>
    %78 = arith.mulf %76, %77 : vector<8x1xf32>
    %79 = arith.mulf %73, %73 : vector<8x1xf32>
    %80 = arith.subf %78, %79 : vector<8x1xf32>
    %cst_48 = arith.constant 0.000000e+00 : f32
    %81 = vector.broadcast %cst_48 : f32 to vector<8x1xf32>
    %82 = arith.maximumf %80, %81 : vector<8x1xf32>
    %83 = vector.broadcast %73 : vector<8x1xf32> to vector<8x128xf32>
    %84 = arith.subf %63, %83 : vector<8x128xf32>
    %cst_49 = arith.constant 9.99999974E-6 : f32
    %85 = vector.broadcast %cst_49 : f32 to vector<8x1xf32>
    %86 = arith.addf %82, %85 : vector<8x1xf32>
    %87 = math.rsqrt %86 : vector<8x1xf32>
    %88 = vector.broadcast %87 : vector<8x1xf32> to vector<8x128xf32>
    %89 = arith.mulf %84, %88 : vector<8x128xf32>
    %90 = vector.extract_strided_slice %89 {offsets = [0, 0], sizes = [4, 128], strides = [1, 1]} : vector<8x128xf32> to vector<4x128xf32>
    %91 = vector.extract_strided_slice %89 {offsets = [4, 0], sizes = [4, 128], strides = [1, 1]} : vector<8x128xf32> to vector<4x128xf32>
    %c0_50 = arith.constant 0 : index
    %c128_51 = arith.constant 128 : index
    %92 = vector.load %arg6[%c0_50, %c128_51] : memref<4x256xf32, #tpu.memory_space<vmem>>, vector<4x128xf32>
    %93 = arith.negf %90 : vector<4x128xf32>
    %94 = math.exp %93 : vector<4x128xf32>
    %cst_52 = arith.constant 1.000000e+00 : f32
    %95 = vector.broadcast %cst_52 : f32 to vector<4x128xf32>
    %96 = arith.addf %95, %94 : vector<4x128xf32>
    %97 = arith.divf %95, %96 : vector<4x128xf32>
    %98 = arith.mulf %97, %91 : vector<4x128xf32>
    %cst_53 = arith.constant 1.000000e+00 : f32
    %99 = vector.broadcast %cst_53 : f32 to vector<4x128xf32>
    %100 = arith.subf %99, %97 : vector<4x128xf32>
    %101 = arith.mulf %100, %92 : vector<4x128xf32>
    %102 = arith.addf %98, %101 : vector<4x128xf32>
    %cst_54 = arith.constant 0.000000e+00 : f32
    %103 = vector.shape_cast %65 : vector<1x128xi1> to vector<1x128xi1>
    %104 = vector.broadcast %103 : vector<1x128xi1> to vector<4x128xi1>
    %105 = vector.broadcast %cst_54 : f32 to vector<4x128xf32>
    %106 = arith.select %104, %102, %105 : vector<4x128xi1>, vector<4x128xf32>
    %c0_55 = arith.constant 0 : index
    %c128_56 = arith.constant 128 : index
    %107 = vector.load %arg6[%c0_55, %c128_56] : memref<4x256xf32, #tpu.memory_space<vmem>>, vector<4x128xf32>
    tpu.vector_store %arg6[%c0_55, %c128_56], %106 {strides = array<i32>} : memref<4x256xf32, #tpu.memory_space<vmem>>, vector<4x128xf32>,
    %c0_57 = arith.constant 0 : index
    %c0_58 = arith.constant 0 : index
    %108 = vector.load %arg4[%c0_57, %c0_58] : memref<8x8xf32, #tpu.memory_space<vmem>>, vector<8x8xf32>
    %c0_59 = arith.constant 0 : index
    %c124 = arith.constant 124 : index
    %109 = vector.load %arg6[%c0_59, %c124] : memref<4x256xf32, #tpu.memory_space<vmem>>, vector<4x128xf32>
    %c0_60 = arith.constant 0 : index
    %c0_61 = arith.constant 0 : index
    %110 = vector.load %arg7[%c0_60, %c0_61] : memref<8x128xf32, #tpu.memory_space<vmem>>, vector<4x128xf32>
    tpu.vector_store %arg7[%c0_60, %c0_61], %109 {strides = array<i32>} : memref<8x128xf32, #tpu.memory_space<vmem>>, vector<4x128xf32>,
    %c0_62 = arith.constant 0 : index
    %c128_63 = arith.constant 128 : index
    %111 = vector.load %arg6[%c0_62, %c128_63] : memref<4x256xf32, #tpu.memory_space<vmem>>, vector<4x128xf32>
    %c4_64 = arith.constant 4 : index
    %c0_65 = arith.constant 0 : index
    %112 = vector.load %arg7[%c4_64, %c0_65] : memref<8x128xf32, #tpu.memory_space<vmem>>, vector<4x128xf32>
    tpu.vector_store %arg7[%c4_64, %c0_65], %111 {strides = array<i32>} : memref<8x128xf32, #tpu.memory_space<vmem>>, vector<4x128xf32>,
    %c0_66 = arith.constant 0 : index
    %c0_67 = arith.constant 0 : index
    %113 = vector.load %arg7[%c0_66, %c0_67] : memref<8x128xf32, #tpu.memory_space<vmem>>, vector<8x128xf32>
    %cst_68 = arith.constant dense<0.000000e+00> : vector<8x128xf32>
    %114 = tpu.matmul %108, %113, %cst_68 {dimension_numbers = #tpu.dot_dimension_numbers<[1], [0], [0], [1], [0, 0, 1, 1], [], []>} : vector<8x8xf32>, vector<8x128xf32>, vector<8x128xf32> -> vector<8x128xf32>
    %c16_i32_69 = arith.constant 16 : i32
    %115 = vector.broadcast %c16_i32_69 : i32 to vector<1x128xi32>
    %116 = arith.cmpi slt, %5, %115 : vector<1x128xi32>
    %cst_70 = arith.constant 0.000000e+00 : f32
    %117 = vector.shape_cast %116 : vector<1x128xi1> to vector<1x128xi1>
    %118 = vector.broadcast %117 : vector<1x128xi1> to vector<8x128xi1>
    %119 = vector.broadcast %cst_70 : f32 to vector<8x128xf32>
    %120 = arith.select %118, %114, %119 : vector<8x128xi1>, vector<8x128xf32>
    %cst_71 = arith.constant dense<0.000000e+00> : vector<8xf32>
    %121 = vector.multi_reduction <add>, %120, %cst_71 [1] : vector<8x128xf32> to vector<8xf32>
    %122 = vector.shape_cast %121 : vector<8xf32> to vector<8x1xf32>
    %cst_72 = arith.constant 6.250000e-02 : f32
    %123 = vector.broadcast %cst_72 : f32 to vector<8x1xf32>
    %124 = arith.mulf %122, %123 : vector<8x1xf32>
    %125 = arith.mulf %120, %120 : vector<8x128xf32>
    %cst_73 = arith.constant dense<0.000000e+00> : vector<8xf32>
    %126 = vector.multi_reduction <add>, %125, %cst_73 [1] : vector<8x128xf32> to vector<8xf32>
    %127 = vector.shape_cast %126 : vector<8xf32> to vector<8x1xf32>
    %cst_74 = arith.constant 6.250000e-02 : f32
    %128 = vector.broadcast %cst_74 : f32 to vector<8x1xf32>
    %129 = arith.mulf %127, %128 : vector<8x1xf32>
    %130 = arith.mulf %124, %124 : vector<8x1xf32>
    %131 = arith.subf %129, %130 : vector<8x1xf32>
    %cst_75 = arith.constant 0.000000e+00 : f32
    %132 = vector.broadcast %cst_75 : f32 to vector<8x1xf32>
    %133 = arith.maximumf %131, %132 : vector<8x1xf32>
    %134 = vector.broadcast %124 : vector<8x1xf32> to vector<8x128xf32>
    %135 = arith.subf %114, %134 : vector<8x128xf32>
    %cst_76 = arith.constant 9.99999974E-6 : f32
    %136 = vector.broadcast %cst_76 : f32 to vector<8x1xf32>
    %137 = arith.addf %133, %136 : vector<8x1xf32>
    %138 = math.rsqrt %137 : vector<8x1xf32>
    %139 = vector.broadcast %138 : vector<8x1xf32> to vector<8x128xf32>
    %140 = arith.mulf %135, %139 : vector<8x128xf32>
    %141 = vector.extract_strided_slice %140 {offsets = [0, 0], sizes = [4, 128], strides = [1, 1]} : vector<8x128xf32> to vector<4x128xf32>
    %142 = vector.extract_strided_slice %140 {offsets = [4, 0], sizes = [4, 128], strides = [1, 1]} : vector<8x128xf32> to vector<4x128xf32>
    %c0_77 = arith.constant 0 : index
    %c128_78 = arith.constant 128 : index
    %143 = vector.load %arg6[%c0_77, %c128_78] : memref<4x256xf32, #tpu.memory_space<vmem>>, vector<4x128xf32>
    %144 = arith.negf %141 : vector<4x128xf32>
    %145 = math.exp %144 : vector<4x128xf32>
    %cst_79 = arith.constant 1.000000e+00 : f32
    %146 = vector.broadcast %cst_79 : f32 to vector<4x128xf32>
    %147 = arith.addf %146, %145 : vector<4x128xf32>
    %148 = arith.divf %146, %147 : vector<4x128xf32>
    %149 = arith.mulf %148, %142 : vector<4x128xf32>
    %cst_80 = arith.constant 1.000000e+00 : f32
    %150 = vector.broadcast %cst_80 : f32 to vector<4x128xf32>
    %151 = arith.subf %150, %148 : vector<4x128xf32>
    %152 = arith.mulf %151, %143 : vector<4x128xf32>
    %153 = arith.addf %149, %152 : vector<4x128xf32>
    %c0_81 = arith.constant 0 : index
    %c0_82 = arith.constant 0 : index
    %c0_83 = arith.constant 0 : index
    %154 = vector.load %arg5[%c0_81, %c0_82, %c0_83] : memref<1x4x128xf32, #tpu.memory_space<vmem>>, vector<1x4x128xf32>
    %155 = vector.shape_cast %154 : vector<1x4x128xf32> to vector<4x128xf32>
    %156 = vector.shape_cast %153 : vector<4x128xf32> to vector<1x4x128xf32>
    tpu.vector_store %arg5[%c0_81, %c0_82, %c0_83], %156 {strides = array<i32>} : memref<1x4x128xf32, #tpu.memory_space<vmem>>, vector<1x4x128xf32>,
    return
  }
  func.func @transform_0(%arg0: i32) -> (i32, i32, i32) {
    %c0_i32 = arith.constant 0 : i32
    %c0_i32_0 = arith.constant 0 : i32
    %c0_i32_1 = arith.constant 0 : i32
    return %arg0, %c0_i32, %c0_i32_0 : i32, i32, i32
  }
  func.func @transform_1(%arg0: i32) -> (i32, i32) {
    %c0_i32 = arith.constant 0 : i32
    %c0_i32_0 = arith.constant 0 : i32
    %c0_i32_1 = arith.constant 0 : i32
    return %c0_i32, %c0_i32_0 : i32, i32
  }
  func.func @transform_2(%arg0: i32) -> (i32, i32) {
    %c0_i32 = arith.constant 0 : i32
    %c0_i32_0 = arith.constant 0 : i32
    %c0_i32_1 = arith.constant 0 : i32
    return %c0_i32, %c0_i32_0 : i32, i32
  }
  func.func @transform_3(%arg0: i32) -> (i32, i32) {
    %c0_i32 = arith.constant 0 : i32
    %c0_i32_0 = arith.constant 0 : i32
    %c0_i32_1 = arith.constant 0 : i32
    return %c0_i32, %c0_i32_0 : i32, i32
  }
  func.func @transform_4(%arg0: i32) -> (i32, i32, i32) {
    %c0_i32 = arith.constant 0 : i32
    %c0_i32_0 = arith.constant 0 : i32
    %c0_i32_1 = arith.constant 0 : i32
    return %arg0, %c0_i32, %c0_i32_0 : i32, i32, i32
  }
}

</mosaic_0001>

<llo_original>
// kernel: tpu_custom_call.1
$region0: #{tpu_custom_call.1}
  #allocation0 [shape = 'u32[]', space=smem, size = 0x4, offset = 0x4, fixed_abs, tag = 'smem constant byte address 0x4 - core index']
  #allocation1 [shape = 'u32[144,128]{1,0:T(1,128)}', space=vmem, size = 0x12000, scoped, tag = 'internal scratch']
  #allocation2 [shape = 'f32[4,256]{1,0:T(4,128)}', space=vmem, size = 0x1000, scoped, tag = 'scratch operand']
  #allocation3 [shape = 'f32[8,128]{1,0:T(8,128)}', space=vmem, size = 0x1000, scoped, tag = 'scratch operand']
  %s0 = inlined_call_operand.hbm [shape: f32[2,4,128], index: 0, kind: input, shape index: {}]
  %s1 = inlined_call_operand.hbm [shape: f32[8,8], index: 1, kind: input, shape index: {}]
  %s2 = inlined_call_operand.hbm [shape: f32[8,8], index: 2, kind: input, shape index: {}]
  %s3 = inlined_call_operand.vmem [shape: f32[8,8], index: 3, kind: input, shape index: {}]
  %s4 = inlined_call_operand.hbm [shape: f32[2,4,128], index: 4, kind: output, shape index: {}]
  %s5 = sld [smem:[#allocation0]]
  $region61: #{tpu_custom_call.1} parent=0
    _
  %s7 = ssub.s32 1, %s5
  %s8 = scalar_select 0, %s7, %s5
  $region1: #{tpu_custom_call.1} parent=0
    #allocation4 [shape = 'u8[4096]{0}', space=vmem, size = 0x1000, scoped, tag = 'input window, operand 0']
    #allocation5 [shape = 's32[2]{0}', space=sflag, size = 0x8, scoped, tag = 'scoped memory for tpu_custom_call.1']
    #allocation6 [shape = 's32[2]{0}', space=sflag, size = 0x8, scoped, tag = 'scoped memory for tpu_custom_call.1']
    #allocation7 [shape = 'u8[4096]{0}', space=vmem, size = 0x1000, scoped, tag = 'input window, operand 1, single buffered']
    #allocation8 [shape = 's32[1]{0}', space=sflag, size = 0x4, scoped, tag = 'scoped memory for tpu_custom_call.1']
    #allocation9 [shape = 'u8[4096]{0}', space=vmem, size = 0x1000, scoped, tag = 'input window, operand 2, single buffered']
    #allocation10 [shape = 'u8[4096]{0}', space=vmem, size = 0x1000, scoped, tag = 'output window, operand 0']
    %9 = vsyncpa [#allocation5], 0
    %s10 = scalar_lea.sflag [#allocation5], 1
    %11 = vsyncpa %s10, 0
    %12 = vsyncpa [#allocation8], 0
    %13 = vsyncpa [#allocation6], 0
    %s14 = scalar_lea.sflag [#allocation6], 1
    %15 = vsyncpa %s14, 0
    loop: start=0, step=1, limit=4
    $region2: #{tpu_custom_call.1} parent=1 // loop_pre_header
      _
    $region3: #{tpu_custom_call.1} parent=1 // loop_header
      %s17 = sphi 0, %s21
      %p18 = scmp.ge.s32.totalorder %s17, 4
      %s27 = sphi 0, %s29
      %s30 = sphi 0, %s27
      %s31 = sphi 0, %s30
      %s47 = sphi 0, %s31
      %s51 = sphi 0, %s51
      %s53 = sphi 0, %s51
      %s54 = sphi 0, %s53
      %s68 = sphi 0, %s54
      %s72 = sphi 0, %s72
      %s74 = sphi 0, %s72
      %s75 = sphi 0, %s74
      %s89 = sphi 0, %s75
      %s93 = sphi 0, %s93
      %s95 = sphi 0, %s93
      %s96 = sphi 0, %s95
      %s110 = sphi 0, %s96
      %s116 = sphi 0, %s118
      %s119 = sphi 0, %s116
      %s120 = sphi 0, %s119
      %s136 = sphi 0, %s120
    $region4: #{tpu_custom_call.1} parent=1 // loop_header_branch
      %20 = sbr.rel (%p18) target = $region8
    $region5: #{tpu_custom_call.1} parent=1 // loop_body
      %s22 = ssub.s32 %s17, 1
      %s23 = ssub.s32 %s17, 2
      %s24 = sadd.s32 %s17, 1
      %s25 = ssub.s32 %s17, %s24
      %p26 = scmp.eq.s32.totalorder %s25, 0
      %s28 = sadd.s32 %s27, 1
      %s29 = scalar_select %p26, %s27, %s28
      %p32 = pneg %p26
      %p33 = scmp.eq.s32.totalorder %s17, 1
      %p34 = por %p32, %p33
      %p35 = scmp.ne.s32.totalorder %s27, %s30
      %p36 = scmp.eq.s32.totalorder %s17, 0
      %p37 = por %p35, %p36
      %p38 = scmp.ne.s32.totalorder %s27, %s30
      %p39 = scmp.eq.s32.totalorder %s22, 1
      %p40 = por %p38, %p39
      %p41 = scmp.ne.s32.totalorder %s30, %s31
      %p42 = scmp.eq.s32.totalorder %s22, 0
      %p43 = por %p41, %p42
      %p44 = scmp.ne.s32.totalorder %s30, %s31
      %p45 = scmp.eq.s32.totalorder %s23, 1
      %p46 = por %p44, %p45
      %p48 = scmp.ne.s32.totalorder %s31, %s47
      %p49 = scmp.eq.s32.totalorder %s23, 0
      %p50 = por %p48, %p49
      %s52 = sadd.s32 %s51, 1
      %p55 = scmp.eq.s32.totalorder %s17, 1
      %p56 = scmp.ne.s32.totalorder %s51, %s53
      %p57 = scmp.eq.s32.totalorder %s17, 0
      %p58 = por %p56, %p57
      %p59 = scmp.ne.s32.totalorder %s51, %s53
      %p60 = scmp.eq.s32.totalorder %s22, 1
      %p61 = por %p59, %p60
      %p62 = scmp.ne.s32.totalorder %s53, %s54
      %p63 = scmp.eq.s32.totalorder %s22, 0
      %p64 = por %p62, %p63
      %p65 = scmp.ne.s32.totalorder %s53, %s54
      %p66 = scmp.eq.s32.totalorder %s23, 1
      %p67 = por %p65, %p66
      %p69 = scmp.ne.s32.totalorder %s54, %s68
      %p70 = scmp.eq.s32.totalorder %s23, 0
      %p71 = por %p69, %p70
      %s73 = sadd.s32 %s72, 1
      %p76 = scmp.eq.s32.totalorder %s17, 1
      %p77 = scmp.ne.s32.totalorder %s72, %s74
      %p78 = scmp.eq.s32.totalorder %s17, 0
      %p79 = por %p77, %p78
      %p80 = scmp.ne.s32.totalorder %s72, %s74
      %p81 = scmp.eq.s32.totalorder %s22, 1
      %p82 = por %p80, %p81
      %p83 = scmp.ne.s32.totalorder %s74, %s75
      %p84 = scmp.eq.s32.totalorder %s22, 0
      %p85 = por %p83, %p84
      %p86 = scmp.ne.s32.totalorder %s74, %s75
      %p87 = scmp.eq.s32.totalorder %s23, 1
      %p88 = por %p86, %p87
      %p90 = scmp.ne.s32.totalorder %s75, %s89
      %p91 = scmp.eq.s32.totalorder %s23, 0
      %p92 = por %p90, %p91
      %s94 = sadd.s32 %s93, 1
      %p97 = scmp.eq.s32.totalorder %s17, 1
      %p98 = scmp.ne.s32.totalorder %s93, %s95
      %p99 = scmp.eq.s32.totalorder %s17, 0
      %p100 = por %p98, %p99
      %p101 = scmp.ne.s32.totalorder %s93, %s95
      %p102 = scmp.eq.s32.totalorder %s22, 1
      %p103 = por %p101, %p102
      %p104 = scmp.ne.s32.totalorder %s95, %s96
      %p105 = scmp.eq.s32.totalorder %s22, 0
      %p106 = por %p104, %p105
      %p107 = scmp.ne.s32.totalorder %s95, %s96
      %p108 = scmp.eq.s32.totalorder %s23, 1
      %p109 = por %p107, %p108
      %p111 = scmp.ne.s32.totalorder %s96, %s110
      %p112 = scmp.eq.s32.totalorder %s23, 0
      %p113 = por %p111, %p112
      %s114 = ssub.s32 %s17, %s24
      %p115 = scmp.eq.s32.totalorder %s114, 0
      %s117 = sadd.s32 %s116, 1
      %s118 = scalar_select %p115, %s116, %s117
      %p121 = pneg %p115
      %p122 = scmp.eq.s32.totalorder %s17, 1
      %p123 = por %p121, %p122
      %p124 = scmp.ne.s32.totalorder %s116, %s119
      %p125 = scmp.eq.s32.totalorder %s17, 0
      %p126 = por %p124, %p125
      %p127 = scmp.ne.s32.totalorder %s116, %s119
      %p128 = scmp.eq.s32.totalorder %s22, 1
      %p129 = por %p127, %p128
      %p130 = scmp.ne.s32.totalorder %s119, %s120
      %p131 = scmp.eq.s32.totalorder %s22, 0
      %p132 = por %p130, %p131
      %p133 = scmp.ne.s32.totalorder %s119, %s120
      %p134 = scmp.eq.s32.totalorder %s23, 1
      %p135 = por %p133, %p134
      %p137 = scmp.ne.s32.totalorder %s120, %s136
      %p138 = scmp.eq.s32.totalorder %s23, 0
      %p139 = por %p137, %p138
      %p140 = scmp.le.s32.totalorder 1, %s17
      %p141 = scmp.lt.s32.totalorder %s17, 3
      %p142 = pnand %p140, %p141
      %p143 = pneg %p142
      // Predicated region
      $region9: #{tpu_custom_call.1} parent=5 // pred_check
        _
      $region10: #{tpu_custom_call.1} parent=5 // pred_check_branch
        %145 = sbr.rel (%p142) target = $region12
      $region11: #{tpu_custom_call.1} parent=5 // pred_region
        %s146 = ssub.s32 %s17, 1
        // Predicated region
        $region13: #{tpu_custom_call.1} parent=11 // pred_check
          %p147 = pneg %p64
        $region14: #{tpu_custom_call.1} parent=11 // pred_check_branch
          %149 = sbr.rel (%p147) target = $region16
        $region15: #{tpu_custom_call.1} parent=11 // pred_region
          %s151 = ssub.s32 128, 128
          %152 = vsyncadd [#allocation8], %s151
          %s154 = sshll.u32 [#allocation7], 4
          %s155 = int_to_ptr.vmem [resolvable:$true] %s154
          %157 = dma.hbm_to_vmem [thread:$0]  %s1, 128, %s155, [#allocation8]
        $region16: #{tpu_custom_call.1} parent=11 // pred_fallthru
          _
        // Predicated region
        $region17: #{tpu_custom_call.1} parent=11 // pred_check
          %p158 = pneg %p85
        $region18: #{tpu_custom_call.1} parent=11 // pred_check_branch
          %160 = sbr.rel (%p158) target = $region20
        $region19: #{tpu_custom_call.1} parent=11 // pred_region
          %s162 = ssub.s32 128, 128
          %163 = vsyncadd [#allocation8], %s162
          %s165 = sshll.u32 [#allocation9], 4
          %s166 = int_to_ptr.vmem [resolvable:$true] %s165
          %168 = dma.hbm_to_vmem [thread:$0]  %s2, 128, %s166, [#allocation8]
        $region20: #{tpu_custom_call.1} parent=11 // pred_fallthru
          _
        // Predicated region
        $region21: #{tpu_custom_call.1} parent=11 // pred_check
          %p169 = pneg %p106
        $region22: #{tpu_custom_call.1} parent=11 // pred_check_branch
          %171 = sbr.rel (%p169) target = $region24
        $region23: #{tpu_custom_call.1} parent=11 // pred_region
          _
        $region24: #{tpu_custom_call.1} parent=11 // pred_fallthru
          _
      $region12: #{tpu_custom_call.1} parent=5 // pred_fallthru
        _
      %p172 = scmp.lt.s32.totalorder %s17, 2
      // Predicated region
      $region25: #{tpu_custom_call.1} parent=5 // pred_check
        %p173 = pneg %p172
      $region26: #{tpu_custom_call.1} parent=5 // pred_check_branch
        %175 = sbr.rel (%p173) target = $region28
      $region27: #{tpu_custom_call.1} parent=5 // pred_region
        // Predicated region
        $region29: #{tpu_custom_call.1} parent=27 // pred_check
          %p176 = pneg %p37
        $region30: #{tpu_custom_call.1} parent=27 // pred_check_branch
          %178 = sbr.rel (%p176) target = $region32
        $region31: #{tpu_custom_call.1} parent=27 // pred_region
          %s179 = sand.u32 %s27, 1
          %s180 = scalar_lea.sflag [#allocation5], %s179
          %s181 = sand.u32 %s27, 1
          %s182 = smul.addr %s181, 4
          %s183 = scalar_lea.vmem [#allocation4], %s182
          %s185 = ssub.s32 64, 64
          %186 = vsyncadd %s180, %s185
          %s187 = smul.addr %s17, 64
          %s188 = scalar_lea.hbm %s0, %s187
          %s190 = sshll.u32 %s183, 4
          %s191 = int_to_ptr.vmem [resolvable:$true] %s190
          %193 = dma.hbm_to_vmem [thread:$0]  %s188, 64, %s191, %s180
        $region32: #{tpu_custom_call.1} parent=27 // pred_fallthru
          _
      $region28: #{tpu_custom_call.1} parent=5 // pred_fallthru
        _
      %p194 = scmp.le.s32.totalorder 1, %s17
      %p195 = scmp.lt.s32.totalorder %s17, 3
      %p196 = pnand %p194, %p195
      %p197 = pneg %p196
      // Predicated region
      $region33: #{tpu_custom_call.1} parent=5 // pred_check
        _
      $region34: #{tpu_custom_call.1} parent=5 // pred_check_branch
        %199 = sbr.rel (%p196) target = $region36
      $region35: #{tpu_custom_call.1} parent=5 // pred_region
        %s200 = ssub.s32 %s17, 1
        %s201 = sand.u32 %s30, 1
        %s202 = scalar_lea.sflag [#allocation5], %s201
        %s203 = sand.u32 %s30, 1
        %s204 = smul.addr %s203, 4
        %s205 = scalar_lea.vmem [#allocation4], %s204
        // Predicated region
        $region37: #{tpu_custom_call.1} parent=35 // pred_check
          %p206 = pneg %p43
        $region38: #{tpu_custom_call.1} parent=35 // pred_check_branch
          %208 = sbr.rel (%p206) target = $region40
        $region39: #{tpu_custom_call.1} parent=35 // pred_region
          %209 = dma.done %s202, 64
        $region40: #{tpu_custom_call.1} parent=35 // pred_fallthru
          _
        // Predicated region
        $region41: #{tpu_custom_call.1} parent=35 // pred_check
          %p210 = pneg %p64
        $region42: #{tpu_custom_call.1} parent=35 // pred_check_branch
          %212 = sbr.rel (%p210) target = $region44
        $region43: #{tpu_custom_call.1} parent=35 // pred_region
          %213 = dma.done [#allocation8], 128
        $region44: #{tpu_custom_call.1} parent=35 // pred_fallthru
          _
        // Predicated region
        $region45: #{tpu_custom_call.1} parent=35 // pred_check
          %p214 = pneg %p85
        $region46: #{tpu_custom_call.1} parent=35 // pred_check_branch
          %216 = sbr.rel (%p214) target = $region48
        $region47: #{tpu_custom_call.1} parent=35 // pred_region
          %217 = dma.done [#allocation8], 128
        $region48: #{tpu_custom_call.1} parent=35 // pred_fallthru
          _
        %s218 = sand.u32 %s30, 1
        %s219 = scalar_lea.sflag [#allocation5], %s218
        %s220 = sand.u32 %s30, 1
        %s221 = smul.addr %s220, 4
        %s222 = scalar_lea.vmem [#allocation4], %s221
        %p223 = pneg %p43
        %p224 = pneg %p40
        %p225 = pneg %p64
        %p226 = pneg %p61
        %p227 = pneg %p85
        %p228 = pneg %p82
        %p229 = pneg %p106
        %p230 = pneg %p103
        %p231 = pneg %p132
        %p232 = pneg %p129
        %s233 = sand.u32 %s119, 1
        %s234 = scalar_lea.sflag [#allocation6], %s233
        %s235 = sand.u32 %s119, 1
        %s236 = smul.addr %s235, 4
        %s237 = scalar_lea.vmem [#allocation10], %s236
        %238 = vst [vmem:[#allocation2] sm:$0xf] 0.0
        %v239 = vld [vmem:[%s205] sm:$0xf]
        %240 = vst [vmem:[#allocation2 + $0x4] sm:$0xf] %v239
        %v241 = vlaneseq
        %v242 = vand.u32 %v241, 127
        %v243 = vld [vmem:[#allocation7] sm:$0xff]
        %v244 = vld [vmem:[#allocation2] sm:$0xff]
        %v246 = vcombine.high %v244, %v244
        %247 = vrot.lane.b32.xlu0 %v244, 1
        %v248 = vpop.permute.xlu0 %247
        %249 = vrot.lane.b32.xlu0 %v246, 1
        %v250 = vpop.permute.xlu0 %249
        %vm251 = vcmask 7168
        %v252 = vsel %vm251, %v248, %v250
        %254 = vst [vmem:[#allocation3] sm:$0xf] %v252
        %v255 = vld [vmem:[#allocation2 + $0x4] sm:$0xf]
        %256 = vst [vmem:[#allocation3 + $0x4] sm:$0xf] %v255
        %v257 = vld [vmem:[#allocation3] sm:$0xff]
        %vm258 = vcmask 64512
        %v260 = vsel %vm258, %v243, 0
        %262 = vmatprep.subr.mxu0 0.0
        %263 = vmatpush1.msra.mxu0 %v257
        %264 = vmatprep.subr.mxu0 0.0
        %265 = vmatpush1.msra.mxu0 0.0
        %266 = vmatprep.subr.mxu0 0.0
        %267 = vmatpush1.msra.mxu0 0.0
        %268 = vmatprep.subr.mxu0 0.0
        %269 = vmatpush1.msra.mxu0 0.0
        %270 = vmatprep.subr.mxu0 0.0
        %271 = vmatpush1.msra.mxu0 0.0
        %272 = vmatprep.subr.mxu0 0.0
        %273 = vmatpush1.msra.mxu0 0.0
        %274 = vmatprep.subr.mxu0 0.0
        %275 = vmatpush1.msra.mxu0 0.0
        %276 = vmatprep.subr.mxu0 0.0
        %277 = vmatpush1.msra.mxu0 0.0
        %278 = vmatprep.subr.mxu0 0.0
        %279 = vmatpush1.msra.mxu0 0.0
        %280 = vmatprep.subr.mxu0 0.0
        %281 = vmatpush1.msra.mxu0 0.0
        %282 = vmatprep.subr.mxu0 0.0
        %283 = vmatpush1.msra.mxu0 0.0
        %284 = vmatprep.subr.mxu0 0.0
        %285 = vmatpush1.msra.mxu0 0.0
        %286 = vmatprep.subr.mxu0 0.0
        %287 = vmatpush1.msra.mxu0 0.0
        %288 = vmatprep.subr.mxu0 0.0
        %289 = vmatpush1.msra.mxu0 0.0
        %290 = vmatprep.subr.mxu0 0.0
        %291 = vmatpush1.msra.mxu0 0.0
        %292 = vmatprep.subr.mxu0 0.0
        %293 = vmatpush1.msra.mxu0 0.0
        %294 = vmatprep.subr.mxu0 0.0
        %295 = vmatpush1.msra.mxu0 0.0
        %296 = vmatprep.subr.mxu0 0.0
        %297 = vmatpush1.msra.mxu0 0.0
        %298 = vmatprep.subr.mxu0 0.0
        %299 = vmatpush1.msra.mxu0 0.0
        %300 = vmatprep.subr.mxu0 0.0
        %301 = vmatpush1.msra.mxu0 0.0
        %302 = vmatprep.subr.mxu0 0.0
        %303 = vmatpush1.msra.mxu0 0.0
        %304 = vmatprep.subr.mxu0 0.0
        %305 = vmatpush1.msra.mxu0 0.0
        %306 = vmatprep.subr.mxu0 0.0
        %307 = vmatpush1.msra.mxu0 0.0
        %308 = vmatprep.subr.mxu0 0.0
        %309 = vmatpush1.msra.mxu0 0.0
        %310 = vmatprep.subr.mxu0 0.0
        %311 = vmatpush1.msra.mxu0 0.0
        %312 = vmatprep.subr.mxu0 0.0
        %313 = vmatpush1.msra.mxu0 0.0
        %314 = vmatprep.subr.mxu0 0.0
        %315 = vmatpush1.msra.mxu0 0.0
        %316 = vmatprep.subr.mxu0 0.0
        %317 = vmatpush1.msra.mxu0 0.0
        %318 = vmatprep.subr.mxu0 0.0
        %319 = vmatpush1.msra.mxu0 0.0
        %320 = vmatprep.subr.mxu0 0.0
        %321 = vmatpush1.msra.mxu0 0.0
        %322 = vmatprep.subr.mxu0 0.0
        %323 = vmatpush1.msra.mxu0 0.0
        %324 = vmatprep.subr.mxu0 0.0
        %325 = vmatpush1.msra.mxu0 0.0
        %326 = vmatprep.mubr.f32.mxu0 0.0
        %327 = vmatmul.mubr.f32.gmra.mrb[0].mxu0 %v260
        %v328 = vpop.f32.mrb[0].mxu0
        %v329 = vadd.f32 0.0, %v328
        %v330 = vpop.f32.mrb[0].mxu0
        %331 = vdwg.mxu0
        %vm332 = vcmp.lt.s32.totalorder %v242, 16
        %v333 = vsel %vm332, 1, 0
        %vm334 = vcmp.eq.s32.totalorder %v333, 1
        %v335 = vsel %vm334, %v329, 0.0
        %336 = vadd.xlane.f32.xlu0 %v335
        %v337 = vpop.xlane.xlu0 %336
        %v338 = vmul.f32 %v337, 0.0625
        %v339 = vmul.f32 %v335, %v335
        %340 = vadd.xlane.f32.xlu0 %v339
        %v341 = vpop.xlane.xlu0 %340
        %v342 = vmul.f32 %v341, 0.0625
        %v343 = vmul.f32 %v338, %v338
        %v344 = vsub.f32 %v342, %v343
        %v345 = vmax.f32 %v344, 0.0
        %v346 = vsub.f32 %v329, %v338
        %v347 = vadd.f32 %v345, 1e-05
        %v348 = vrsqrt.pop %v347
        %v349 = vmul.f32 %v346, %v348
        %v350 = vld [vmem:[#allocation2 + $0x4] sm:$0xf]
        %v351 = vxor.u32 %v349, 2147483648
        %v352 = vmul.f32 %v351, 1.442695
        %v353 = vpow.pop %v352
        %v354 = vadd.f32 %v353, 1.0
        %v355 = vrcp.pop %v354
        %v356 = vmul.f32 1.0, %v355
        %v358 = vrot.slane %v349, 4
        %v360 = vmul.f32 %v356, %v358
        %v361 = vsub.f32 1.0, %v356
        %v362 = vmul.f32 %v361, %v350
        %v363 = vadd.f32 %v360, %v362
        %v364 = vsel %vm334, %v363, 0.0
        %365 = vst [vmem:[#allocation2 + $0x4] sm:$0xf] %v364
        %v366 = vld [vmem:[#allocation9] sm:$0xff]
        %v367 = vld [vmem:[#allocation2] sm:$0xff]
        %v369 = vcombine.high %v367, %v367
        %370 = vrot.lane.b32.xlu0 %v367, 2
        %v371 = vpop.permute.xlu0 %370
        %372 = vrot.lane.b32.xlu0 %v369, 2
        %v373 = vpop.permute.xlu0 %372
        %vm374 = vcmask 15360
        %v375 = vsel %vm374, %v371, %v373
        %377 = vst [vmem:[#allocation3] sm:$0xf] %v375
        %v378 = vld [vmem:[#allocation2 + $0x4] sm:$0xf]
        %379 = vst [vmem:[#allocation3 + $0x4] sm:$0xf] %v378
        %v380 = vld [vmem:[#allocation3] sm:$0xff]
        %v382 = vsel %vm258, %v366, 0
        %384 = vmatprep.subr.mxu0 0.0
        %385 = vmatpush1.msra.mxu0 %v380
        %386 = vmatprep.subr.mxu0 0.0
        %387 = vmatpush1.msra.mxu0 0.0
        %388 = vmatprep.subr.mxu0 0.0
        %389 = vmatpush1.msra.mxu0 0.0
        %390 = vmatprep.subr.mxu0 0.0
        %391 = vmatpush1.msra.mxu0 0.0
        %392 = vmatprep.subr.mxu0 0.0
        %393 = vmatpush1.msra.mxu0 0.0
        %394 = vmatprep.subr.mxu0 0.0
        %395 = vmatpush1.msra.mxu0 0.0
        %396 = vmatprep.subr.mxu0 0.0
        %397 = vmatpush1.msra.mxu0 0.0
        %398 = vmatprep.subr.mxu0 0.0
        %399 = vmatpush1.msra.mxu0 0.0
        %400 = vmatprep.subr.mxu0 0.0
        %401 = vmatpush1.msra.mxu0 0.0
        %402 = vmatprep.subr.mxu0 0.0
        %403 = vmatpush1.msra.mxu0 0.0
        %404 = vmatprep.subr.mxu0 0.0
        %405 = vmatpush1.msra.mxu0 0.0
        %406 = vmatprep.subr.mxu0 0.0
        %407 = vmatpush1.msra.mxu0 0.0
        %408 = vmatprep.subr.mxu0 0.0
        %409 = vmatpush1.msra.mxu0 0.0
        %410 = vmatprep.subr.mxu0 0.0
        %411 = vmatpush1.msra.mxu0 0.0
        %412 = vmatprep.subr.mxu0 0.0
        %413 = vmatpush1.msra.mxu0 0.0
        %414 = vmatprep.subr.mxu0 0.0
        %415 = vmatpush1.msra.mxu0 0.0
        %416 = vmatprep.subr.mxu0 0.0
        %417 = vmatpush1.msra.mxu0 0.0
        %418 = vmatprep.subr.mxu0 0.0
        %419 = vmatpush1.msra.mxu0 0.0
        %420 = vmatprep.subr.mxu0 0.0
        %421 = vmatpush1.msra.mxu0 0.0
        %422 = vmatprep.subr.mxu0 0.0
        %423 = vmatpush1.msra.mxu0 0.0
        %424 = vmatprep.subr.mxu0 0.0
        %425 = vmatpush1.msra.mxu0 0.0
        %426 = vmatprep.subr.mxu0 0.0
        %427 = vmatpush1.msra.mxu0 0.0
        %428 = vmatprep.subr.mxu0 0.0
        %429 = vmatpush1.msra.mxu0 0.0
        %430 = vmatprep.subr.mxu0 0.0
        %431 = vmatpush1.msra.mxu0 0.0
        %432 = vmatprep.subr.mxu0 0.0
        %433 = vmatpush1.msra.mxu0 0.0
        %434 = vmatprep.subr.mxu0 0.0
        %435 = vmatpush1.msra.mxu0 0.0
        %436 = vmatprep.subr.mxu0 0.0
        %437 = vmatpush1.msra.mxu0 0.0
        %438 = vmatprep.subr.mxu0 0.0
        %439 = vmatpush1.msra.mxu0 0.0
        %440 = vmatprep.subr.mxu0 0.0
        %441 = vmatpush1.msra.mxu0 0.0
        %442 = vmatprep.subr.mxu0 0.0
        %443 = vmatpush1.msra.mxu0 0.0
        %444 = vmatprep.subr.mxu0 0.0
        %445 = vmatpush1.msra.mxu0 0.0
        %446 = vmatprep.subr.mxu0 0.0
        %447 = vmatpush1.msra.mxu0 0.0
        %448 = vmatprep.mubr.f32.mxu0 0.0
        %449 = vmatmul.mubr.f32.gmra.mrb[0].mxu0 %v382
        %v450 = vpop.f32.mrb[0].mxu0
        %v451 = vadd.f32 0.0, %v450
        %v452 = vpop.f32.mrb[0].mxu0
        %453 = vdwg.mxu0
        %v454 = vsel %vm334, %v451, 0.0
        %455 = vadd.xlane.f32.xlu0 %v454
        %v456 = vpop.xlane.xlu0 %455
        %v457 = vmul.f32 %v456, 0.0625
        %v458 = vmul.f32 %v454, %v454
        %459 = vadd.xlane.f32.xlu0 %v458
        %v460 = vpop.xlane.xlu0 %459
        %v461 = vmul.f32 %v460, 0.0625
        %v462 = vmul.f32 %v457, %v457
        %v463 = vsub.f32 %v461, %v462
        %v464 = vmax.f32 %v463, 0.0
        %v465 = vsub.f32 %v451, %v457
        %v466 = vadd.f32 %v464, 1e-05
        %v467 = vrsqrt.pop %v466
        %v468 = vmul.f32 %v465, %v467
        %v469 = vld [vmem:[#allocation2 + $0x4] sm:$0xf]
        %v470 = vxor.u32 %v468, 2147483648
        %v471 = vmul.f32 %v470, 1.442695
        %v472 = vpow.pop %v471
        %v473 = vadd.f32 %v472, 1.0
        %v474 = vrcp.pop %v473
        %v475 = vmul.f32 1.0, %v474
        %v477 = vrot.slane %v468, 4
        %v479 = vmul.f32 %v475, %v477
        %v480 = vsub.f32 1.0, %v475
        %v481 = vmul.f32 %v480, %v469
        %v482 = vadd.f32 %v479, %v481
        %v483 = vsel %vm334, %v482, 0.0
        %484 = vst [vmem:[#allocation2 + $0x4] sm:$0xf] %v483
        %v485 = vld [vmem:[%s3] sm:$0xff]
        %v486 = vld [vmem:[#allocation2] sm:$0xff]
        %v488 = vcombine.high %v486, %v486
        %489 = vrot.lane.b32.xlu0 %v486, 4
        %v490 = vpop.permute.xlu0 %489
        %491 = vrot.lane.b32.xlu0 %v488, 4
        %v492 = vpop.permute.xlu0 %491
        %vm493 = vcmask 31744
        %v494 = vsel %vm493, %v490, %v492
        %496 = vst [vmem:[#allocation3] sm:$0xf] %v494
        %v497 = vld [vmem:[#allocation2 + $0x4] sm:$0xf]
        %498 = vst [vmem:[#allocation3 + $0x4] sm:$0xf] %v497
        %v499 = vld [vmem:[#allocation3] sm:$0xff]
        %v501 = vsel %vm258, %v485, 0
        %503 = vmatprep.subr.mxu0 0.0
        %504 = vmatpush1.msra.mxu0 %v499
        %505 = vmatprep.subr.mxu0 0.0
        %506 = vmatpush1.msra.mxu0 0.0
        %507 = vmatprep.subr.mxu0 0.0
        %508 = vmatpush1.msra.mxu0 0.0
        %509 = vmatprep.subr.mxu0 0.0
        %510 = vmatpush1.msra.mxu0 0.0
        %511 = vmatprep.subr.mxu0 0.0
        %512 = vmatpush1.msra.mxu0 0.0
        %513 = vmatprep.subr.mxu0 0.0
        %514 = vmatpush1.msra.mxu0 0.0
        %515 = vmatprep.subr.mxu0 0.0
        %516 = vmatpush1.msra.mxu0 0.0
        %517 = vmatprep.subr.mxu0 0.0
        %518 = vmatpush1.msra.mxu0 0.0
        %519 = vmatprep.subr.mxu0 0.0
        %520 = vmatpush1.msra.mxu0 0.0
        %521 = vmatprep.subr.mxu0 0.0
        %522 = vmatpush1.msra.mxu0 0.0
        %523 = vmatprep.subr.mxu0 0.0
        %524 = vmatpush1.msra.mxu0 0.0
        %525 = vmatprep.subr.mxu0 0.0
        %526 = vmatpush1.msra.mxu0 0.0
        %527 = vmatprep.subr.mxu0 0.0
        %528 = vmatpush1.msra.mxu0 0.0
        %529 = vmatprep.subr.mxu0 0.0
        %530 = vmatpush1.msra.mxu0 0.0
        %531 = vmatprep.subr.mxu0 0.0
        %532 = vmatpush1.msra.mxu0 0.0
        %533 = vmatprep.subr.mxu0 0.0
        %534 = vmatpush1.msra.mxu0 0.0
        %535 = vmatprep.subr.mxu0 0.0
        %536 = vmatpush1.msra.mxu0 0.0
        %537 = vmatprep.subr.mxu0 0.0
        %538 = vmatpush1.msra.mxu0 0.0
        %539 = vmatprep.subr.mxu0 0.0
        %540 = vmatpush1.msra.mxu0 0.0
        %541 = vmatprep.subr.mxu0 0.0
        %542 = vmatpush1.msra.mxu0 0.0
        %543 = vmatprep.subr.mxu0 0.0
        %544 = vmatpush1.msra.mxu0 0.0
        %545 = vmatprep.subr.mxu0 0.0
        %546 = vmatpush1.msra.mxu0 0.0
        %547 = vmatprep.subr.mxu0 0.0
        %548 = vmatpush1.msra.mxu0 0.0
        %549 = vmatprep.subr.mxu0 0.0
        %550 = vmatpush1.msra.mxu0 0.0
        %551 = vmatprep.subr.mxu0 0.0
        %552 = vmatpush1.msra.mxu0 0.0
        %553 = vmatprep.subr.mxu0 0.0
        %554 = vmatpush1.msra.mxu0 0.0
        %555 = vmatprep.subr.mxu0 0.0
        %556 = vmatpush1.msra.mxu0 0.0
        %557 = vmatprep.subr.mxu0 0.0
        %558 = vmatpush1.msra.mxu0 0.0
        %559 = vmatprep.subr.mxu0 0.0
        %560 = vmatpush1.msra.mxu0 0.0
        %561 = vmatprep.subr.mxu0 0.0
        %562 = vmatpush1.msra.mxu0 0.0
        %563 = vmatprep.subr.mxu0 0.0
        %564 = vmatpush1.msra.mxu0 0.0
        %565 = vmatprep.subr.mxu0 0.0
        %566 = vmatpush1.msra.mxu0 0.0
        %567 = vmatprep.mubr.f32.mxu0 0.0
        %568 = vmatmul.mubr.f32.gmra.mrb[0].mxu0 %v501
        %v569 = vpop.f32.mrb[0].mxu0
        %v570 = vadd.f32 0.0, %v569
        %v571 = vpop.f32.mrb[0].mxu0
        %572 = vdwg.mxu0
        %v573 = vsel %vm334, %v570, 0.0
        %574 = vadd.xlane.f32.xlu0 %v573
        %v575 = vpop.xlane.xlu0 %574
        %v576 = vmul.f32 %v575, 0.0625
        %v577 = vmul.f32 %v573, %v573
        %578 = vadd.xlane.f32.xlu0 %v577
        %v579 = vpop.xlane.xlu0 %578
        %v580 = vmul.f32 %v579, 0.0625
        %v581 = vmul.f32 %v576, %v576
        %v582 = vsub.f32 %v580, %v581
        %v583 = vmax.f32 %v582, 0.0
        %v584 = vsub.f32 %v570, %v576
        %v585 = vadd.f32 %v583, 1e-05
        %v586 = vrsqrt.pop %v585
        %v587 = vmul.f32 %v584, %v586
        %v588 = vld [vmem:[#allocation2 + $0x4] sm:$0xf]
        %v589 = vxor.u32 %v587, 2147483648
        %v590 = vmul.f32 %v589, 1.442695
        %v591 = vpow.pop %v590
        %v592 = vadd.f32 %v591, 1.0
        %v593 = vrcp.pop %v592
        %v594 = vmul.f32 1.0, %v593
        %v596 = vrot.slane %v587, 4
        %v598 = vmul.f32 %v594, %v596
        %v599 = vsub.f32 1.0, %v594
        %v600 = vmul.f32 %v599, %v588
        %v601 = vadd.f32 %v598, %v600
        %602 = vst [vmem:[%s237] sm:$0xf] %v601
        %s603 = sand.u32 %s119, 1
        %s604 = scalar_lea.sflag [#allocation6], %s603
        %s605 = sand.u32 %s119, 1
        %s606 = smul.addr %s605, 4
        %s607 = scalar_lea.vmem [#allocation10], %s606
        // Predicated region
        $region49: #{tpu_custom_call.1} parent=35 // pred_check
          %p608 = pneg %p129
        $region50: #{tpu_custom_call.1} parent=35 // pred_check_branch
          %610 = sbr.rel (%p608) target = $region52
        $region51: #{tpu_custom_call.1} parent=35 // pred_region
          %s612 = ssub.s32 64, 64
          %613 = vsyncadd %s604, %s612
          %s614 = smul.addr %s22, 64
          %s615 = scalar_lea.hbm %s4, %s614
          %s617 = sshll.u32 %s607, 4
          %s618 = int_to_ptr.vmem [resolvable:$true] %s617
          %620 = dma.vmem_to_hbm [thread:$0]  %s618, 64, %s615, %s604
        $region52: #{tpu_custom_call.1} parent=35 // pred_fallthru
          _
      $region36: #{tpu_custom_call.1} parent=5 // pred_fallthru
        _
      %p621 = scmp.le.s32.totalorder 2, %s17
      // Predicated region
      $region53: #{tpu_custom_call.1} parent=5 // pred_check
        %p622 = pneg %p621
      $region54: #{tpu_custom_call.1} parent=5 // pred_check_branch
        %624 = sbr.rel (%p622) target = $region56
      $region55: #{tpu_custom_call.1} parent=5 // pred_region
        %s625 = ssub.s32 %s17, 2
        // Predicated region
        $region57: #{tpu_custom_call.1} parent=55 // pred_check
          %p626 = pneg %p135
        $region58: #{tpu_custom_call.1} parent=55 // pred_check_branch
          %628 = sbr.rel (%p626) target = $region60
        $region59: #{tpu_custom_call.1} parent=55 // pred_region
          %s629 = sand.u32 %s120, 1
          %s630 = scalar_lea.sflag [#allocation6], %s629
          %s631 = sand.u32 %s120, 1
          %s632 = smul.addr %s631, 4
          %s633 = scalar_lea.vmem [#allocation10], %s632
          %634 = dma.done %s630, 64
        $region60: #{tpu_custom_call.1} parent=55 // pred_fallthru
          _
      $region56: #{tpu_custom_call.1} parent=5 // pred_fallthru
        _
    $region6: #{tpu_custom_call.1} parent=1 // loop_footer
      %s21 = sadd.s32 1, %s17
    $region7: #{tpu_custom_call.1} parent=1 // loop_footer_branch
      %16 = sbr.rel target = $region3
    $region8: #{tpu_custom_call.1} parent=1 // loop_exit
      _
    %635 = vsyncpa [#allocation5], 1
    %s636 = scalar_lea.sflag [#allocation5], 1
    %637 = vsyncpa %s636, 1
    %638 = vsyncpa [#allocation8], 1
    %639 = vsyncpa [#allocation6], 1
    %s640 = scalar_lea.sflag [#allocation6], 1
    %641 = vsyncpa %s640, 1

</llo_original>
